<compile_context>
chip_gen: v7x
topology: tpu7x:2x2x1
jax: 0.10.0
libtpu: 0.0.40
codegen_flags: <defaults>
</compile_context>

<pallas_src>
from functools import partial

import jax
import jax.numpy as jnp
from jax.experimental import pallas as pl
from jax.experimental.pallas import tpu as pltpu


def _retrieval_head_kernel(x_ref, p_ref, ip_ref, wt_ref, b_ref, o_ref, acc_ref,
                           *, s_total, tile_s, gem_dtype):
    """x_ref:   (block_n, tile_s, C) channel-last feature tile (C on lanes, S on sublanes)
    p_ref:   (1, C) GeMmp per-channel exponents (f32)
    ip_ref:  (1, C) exact 1/p (f32, precomputed outside)
    wt_ref:  (C, C) linear weight pre-transposed to (in, out), bf16
    b_ref:   (1, C) bias (f32)
    o_ref:   (block_n, C) L2-normalized embedding block
    acc_ref: (block_n, C) f32 scratch: running sum of clamp(x, eps)^p over S."""
    eps = 1e-6
    j = pl.program_id(1)

    @pl.when(j == 0)
    def _init():
        acc_ref[...] = jnp.zeros_like(acc_ref)

    # ---- GeMmp partial sum over this spatial tile (EUP: 2 transcendentals / element) ----
    p = p_ref[...]                                           # (1, C) f32
    x = x_ref[...].astype(gem_dtype)                         # (bn, ts, C)
    xc = jnp.maximum(x, eps)                                 # clamp(x, eps)
    xp = jnp.exp(p.astype(gem_dtype)[:, None, :] * jnp.log(xc))   # x^p, C lane-packed
    if s_total % tile_s != 0:
        # Last spatial tile is padded past S: zero the padded rows before accumulating.
        s0 = j * tile_s
        sid = jax.lax.broadcasted_iota(jnp.int32, (1, tile_s, 1), 1)
        xp = jnp.where(s0 + sid < s_total, xp, jnp.zeros_like(xp))
    acc_ref[...] += jnp.sum(xp.astype(jnp.float32), axis=1)  # cheap sublane reduce -> (bn, C)

    # ---- Finalize on the last spatial step: 1/p root -> Linear (MXU) -> L2N ----
    @pl.when(j == pl.num_programs(1) - 1)
    def _finalize():
        pooled = acc_ref[...] * (1.0 / s_total)              # mean: one constant multiply
        # pooled >= eps^p > 0 for valid rows, so the log is safe (padded batch rows are
        # discarded by the out-of-bounds writeback and cannot affect valid rows).
        gem = jnp.exp(jnp.log(pooled) * ip_ref[...])         # pooled ** (1/p), exact 1/p

        # Flatten: already (bn, C).  Dropout(p=0.5): identity in eval mode.

        # embedding_linear on the MXU: bf16 inputs, f32 accumulation.
        y = jnp.dot(gem.astype(jnp.bfloat16), wt_ref[...],
                    preferred_element_type=jnp.float32) + b_ref[...]

        # L2N: y / (||y||_2 + eps).  Exact reciprocal on (bn, 1) values (negligible cost),
        # keeps the output path free of approx reciprocals.
        nrm = jnp.sqrt(jnp.sum(y * y, axis=-1, keepdims=True))
        o_ref[...] = (y * (1.0 / (nrm + eps))).astype(o_ref.dtype)


def _round_up(v, m):
    return ((v + m - 1) // m) * m


def _auto_tiles(N, S, C, x_itemsize, out_itemsize, budget_bytes, block_n, tile_s):
    """Pick (block_n, tile_s) so the pipelined working set fits in `budget_bytes`."""
    fixed = C * C * 2 + 3 * C * 4                 # bf16 weight (single-buffered) + p, 1/p, bias
    per_bnc = 4 + 2 * out_itemsize + 8            # f32 accumulator + 2 out buffers + y/gem temps
    per_bnsc = 2 * x_itemsize + 8                 # 2 x-tile buffers + f32 xc/xp temps
    avail = max(budget_bytes - fixed, 1)

    if block_n is None:
        block_n = min(_round_up(N, 8), 256)       # MXU M rows; multiple of 8 (no masked stores)
        if N > 8:
            # Keep >= 2 batch grid steps so the "parallel" axis can shard across TensorCores.
            block_n = min(block_n, _round_up(-(-N // 2), 8))
        while block_n > 8 and block_n * C * (per_bnc + min(8, S) * per_bnsc) > avail:
            block_n -= 8

    if tile_s is None:
        max_s = (avail - block_n * C * per_bnc) // max(block_n * C * per_bnsc, 1)
        # Second-minor block dim must be a multiple of 8 or the full extent S.
        tile_s = S if max_s >= S else max(8, (int(max_s) // 8) * 8)
    return block_n, tile_s


def retrieval_head(x_nhwc, p, w, b, *, block_n=None, tile_s=None,
                   vmem_limit_bytes=48 * 1024 * 1024, out_dtype=jnp.float32,
                   use_bf16_gem=False):
    """GeMmp pool -> Flatten -> Dropout(eval) -> Linear -> L2N on a backbone feature map.

    x_nhwc: (N, H, W, C) channel-last feature map.  Emit NHWC (ideally bf16) from the
            backbone: avoiding a layout pass / f32 transfer halves HBM traffic of this
            memory-bound head.  (See retrieval_head_nchw for NCHW inputs.)
    p: (C,) GeMmp exponents.  w: (C, C) PyTorch Linear weight (out, in).  b: (C,) bias."""
    N, H, W, C = x_nhwc.shape
    S = H * W

    x = x_nhwc.reshape(N, S, C)                             # metadata-only reshape
    p2 = p.reshape(1, C).astype(jnp.float32)
    ip2 = (1.0 / p.astype(jnp.float32)).reshape(1, C)       # exact 1/p (feeds an exponent)
    wt = w.T.astype(jnp.bfloat16)                           # (in, out), bf16 for MXU + half DMA
    b2 = b.reshape(1, C).astype(jnp.float32)

    block_n, tile_s = _auto_tiles(
        N, S, C, jnp.dtype(x.dtype).itemsize, jnp.dtype(out_dtype).itemsize,
        int(0.75 * vmem_limit_bytes), block_n, tile_s)

    grid = (pl.cdiv(N, block_n), pl.cdiv(S, tile_s))        # reduction (S) axis last
    gem_dtype = jnp.bfloat16 if use_bf16_gem else jnp.float32
    kernel = partial(_retrieval_head_kernel, s_total=S, tile_s=tile_s, gem_dtype=gem_dtype)

    invariant = dict(pipeline_mode=pl.Buffered(1))          # grid-invariant: single buffer

    return pl.pallas_call(
        kernel,
        out_shape=jax.ShapeDtypeStruct((N, C), out_dtype),
        grid=grid,
        in_specs=[
            pl.BlockSpec((block_n, tile_s, C), lambda i, j: (i, j, 0)),   # streamed x tiles
            pl.BlockSpec((1, C), lambda i, j: (0, 0), **invariant),       # p
            pl.BlockSpec((1, C), lambda i, j: (0, 0), **invariant),       # 1/p (exact)
            pl.BlockSpec((C, C), lambda i, j: (0, 0), **invariant),       # weight (resident)
            pl.BlockSpec((1, C), lambda i, j: (0, 0), **invariant),       # bias
        ],
        out_specs=pl.BlockSpec((block_n, C), lambda i, j: (i, 0)),        # lane-dense output
        scratch_shapes=[pltpu.VMEM((block_n, C), jnp.float32)],           # pooled accumulator
        compiler_params=pltpu.CompilerParams(
            dimension_semantics=("parallel", "arbitrary"),
            vmem_limit_bytes=vmem_limit_bytes),
    )(x, p2, ip2, wt, b2)


def retrieval_head_nchw(x_nchw, p, w, b, **kwargs):
    """Convenience wrapper for an NCHW feature map.  NOTE: the NCHW->NHWC transpose is a full
    extra HBM read+write of the feature map; prefer emitting NHWC from the backbone."""
    return retrieval_head(jnp.transpose(x_nchw, (0, 2, 3, 1)), p, w, b, **kwargs)


def _reference(x_nhwc, p, w, b):
    """Pure-JAX f32 reference of the same forward (eval mode), PyTorch GeM semantics."""
    eps = 1e-6
    N, H, W, C = x_nhwc.shape
    x = x_nhwc.reshape(N, H * W, C).astype(jnp.float32)
    pc = p.reshape(1, 1, C).astype(jnp.float32)
    pooled = jnp.mean(jnp.clip(x, eps, None) ** pc, axis=1)
    gem = pooled ** (1.0 / p.reshape(1, C).astype(jnp.float32))
    y = gem @ w.T.astype(jnp.float32) + b.reshape(1, C).astype(jnp.float32)
    return y / (jnp.linalg.norm(y, axis=1, keepdims=True) + eps)


if __name__ == "__main__":
    # Small shapes consistent with the module: lane-aligned "inchannels"=128, spatial 8x8,
    # batch 16.  tile_s=16 -> 4 spatial reduction steps; auto block_n -> 8 -> 2 batch steps,
    # exercising both the pooled accumulator and the batch pipeline.
    N, C, H, W = 16, 128, 8, 8

    key = jax.random.PRNGKey(0)
    kx, kw, kb = jax.random.split(key, 3)

    # Backbone output feature map, channel-last and bf16 (post-ReLU style: non-negative),
    # as a bf16 NHWC backbone would emit it.
    x = jax.nn.relu(jax.random.normal(kx, (N, H, W, C), dtype=jnp.float32)).astype(jnp.bfloat16)

    # GeMmp: one learnable p per channel, initialized to 3.0 (standard GeM init).
    p = jnp.full((C,), 3.0, dtype=jnp.float32)

    # embedding_linear: Linear(C, C, bias=True), deterministic init.
    bound = 1.0 / jnp.sqrt(jnp.float32(C))
    w = jax.random.uniform(kw, (C, C), minval=-bound, maxval=bound, dtype=jnp.float32)
    b = jax.random.uniform(kb, (C,), minval=-bound, maxval=bound, dtype=jnp.float32)

    out = retrieval_head(x, p, w, b, tile_s=16)
    out = jax.block_until_ready(out)

    ref = _reference(x, p, w, b)
    assert out.shape == (N, C)
    # Tolerance reflects the bf16 MXU path (f32 transcendentals + f32 accumulation elsewhere).
    assert jnp.allclose(out, ref, atol=1e-2, rtol=1e-2), "mismatch vs reference"

    print("KERNEL_OK")
</pallas_src>

<mosaic_0001>
module attributes {stable_mosaic.version = 11 : i64} {
  func.func @_retrieval_head_kernel(%arg0: i32, %arg1: i32, %arg2: memref<8x16x128xbf16, #tpu.memory_space<vmem>>, %arg3: memref<1x128xf32, #tpu.memory_space<vmem>>, %arg4: memref<1x128xf32, #tpu.memory_space<vmem>>, %arg5: memref<128x128xbf16, #tpu.memory_space<vmem>>, %arg6: memref<1x128xf32, #tpu.memory_space<vmem>>, %arg7: memref<8x128xf32, #tpu.memory_space<vmem>>, %arg8: memref<8x128xf32, #tpu.memory_space<vmem>>) attributes {dimension_semantics = [#tpu.dimension_semantics<parallel>, #tpu.dimension_semantics<arbitrary>], iteration_bounds = array<i64: 2, 4>, scalar_prefetch = 0 : i64, scratch_operands = 1 : i64, tpu.core_type = #tpu.core_type<tc>, window_params = [{transform_indices = @transform_0, window_bounds = array<i64: 8, 16, 128>}, {pipeline_mode = #tpu.pipeline_mode<synchronous>, transform_indices = @transform_1, window_bounds = array<i64: 1, 128>}, {pipeline_mode = #tpu.pipeline_mode<synchronous>, transform_indices = @transform_2, window_bounds = array<i64: 1, 128>}, {pipeline_mode = #tpu.pipeline_mode<synchronous>, transform_indices = @transform_3, window_bounds = array<i64: 128, 128>}, {pipeline_mode = #tpu.pipeline_mode<synchronous>, transform_indices = @transform_4, window_bounds = array<i64: 1, 128>}, {transform_indices = @transform_5, window_bounds = array<i64: 8, 128>}]} {
    %c0_i32 = arith.constant 0 : i32
    %0 = arith.cmpi eq, %arg1, %c0_i32 : i32
    %1 = arith.extui %0 : i1 to i32
    %c0_i32_0 = arith.constant 0 : i32
    %2 = arith.cmpi ne, %1, %c0_i32_0 : i32
    scf.if %2 {
      %cst_11 = arith.constant 0.000000e+00 : f32
      %20 = vector.broadcast %cst_11 : f32 to vector<8x128xf32>
      %c0_12 = arith.constant 0 : index
      %c0_13 = arith.constant 0 : index
      %21 = vector.load %arg8[%c0_12, %c0_13] : memref<8x128xf32, #tpu.memory_space<vmem>>, vector<8x128xf32>
      tpu.vector_store %arg8[%c0_12, %c0_13], %20 {strides = array<i32>} : memref<8x128xf32, #tpu.memory_space<vmem>>, vector<8x128xf32>,
    } else {
    }
    %c0 = arith.constant 0 : index
    %c0_1 = arith.constant 0 : index
    %3 = vector.load %arg3[%c0, %c0_1] : memref<1x128xf32, #tpu.memory_space<vmem>>, vector<1x128xf32>
    %c0_2 = arith.constant 0 : index
    %c0_3 = arith.constant 0 : index
    %c0_4 = arith.constant 0 : index
    %4 = vector.load %arg2[%c0_2, %c0_3, %c0_4] : memref<8x16x128xbf16, #tpu.memory_space<vmem>>, vector<8x16x128xbf16>
    %5 = arith.extf %4 : vector<8x16x128xbf16> to vector<8x16x128xf32>
    %cst = arith.constant 9.99999997E-7 : f32
    %6 = vector.broadcast %cst : f32 to vector<8x16x128xf32>
    %7 = arith.maximumf %5, %6 : vector<8x16x128xf32>
    %8 = vector.shape_cast %3 : vector<1x128xf32> to vector<1x1x128xf32>
    %9 = math.log %7 : vector<8x16x128xf32>
    %10 = vector.broadcast %8 : vector<1x1x128xf32> to vector<8x16x128xf32>
    %11 = arith.mulf %10, %9 : vector<8x16x128xf32>
    %12 = math.exp %11 : vector<8x16x128xf32>
    %c0_5 = arith.constant 0 : index
    %c0_6 = arith.constant 0 : index
    %13 = vector.load %arg8[%c0_5, %c0_6] : memref<8x128xf32, #tpu.memory_space<vmem>>, vector<8x128xf32>
    %cst_7 = arith.constant dense<0.000000e+00> : vector<8x128xf32>
    %14 = vector.multi_reduction <add>, %12, %cst_7 [1] : vector<8x16x128xf32> to vector<8x128xf32>
    %15 = arith.addf %13, %14 : vector<8x128xf32>
    %c0_8 = arith.constant 0 : index
    %c0_9 = arith.constant 0 : index
    %16 = vector.load %arg8[%c0_8, %c0_9] : memref<8x128xf32, #tpu.memory_space<vmem>>, vector<8x128xf32>
    tpu.vector_store %arg8[%c0_8, %c0_9], %15 {strides = array<i32>} : memref<8x128xf32, #tpu.memory_space<vmem>>, vector<8x128xf32>,
    %c3_i32 = arith.constant 3 : i32
    %17 = arith.cmpi eq, %arg1, %c3_i32 : i32
    %18 = arith.extui %17 : i1 to i32
    %c0_i32_10 = arith.constant 0 : i32
    %19 = arith.cmpi ne, %18, %c0_i32_10 : i32
    scf.if %19 {
      %c0_11 = arith.constant 0 : index
      %c0_12 = arith.constant 0 : index
      %20 = vector.load %arg8[%c0_11, %c0_12] : memref<8x128xf32, #tpu.memory_space<vmem>>, vector<8x128xf32>
      %cst_13 = arith.constant 1.562500e-02 : f32
      %21 = vector.broadcast %cst_13 : f32 to vector<8x128xf32>
      %22 = arith.mulf %20, %21 : vector<8x128xf32>
      %23 = math.log %22 : vector<8x128xf32>
      %c0_14 = arith.constant 0 : index
      %c0_15 = arith.constant 0 : index
      %24 = vector.load %arg4[%c0_14, %c0_15] : memref<1x128xf32, #tpu.memory_space<vmem>>, vector<1x128xf32>
      %25 = vector.broadcast %24 : vector<1x128xf32> to vector<8x128xf32>
      %26 = arith.mulf %23, %25 : vector<8x128xf32>
      %27 = math.exp %26 : vector<8x128xf32>
      %28 = arith.truncf %27 : vector<8x128xf32> to vector<8x128xbf16>
      %c0_16 = arith.constant 0 : index
      %c0_17 = arith.constant 0 : index
      %29 = vector.load %arg5[%c0_16, %c0_17] : memref<128x128xbf16, #tpu.memory_space<vmem>>, vector<128x128xbf16>
      %cst_18 = arith.constant dense<0.000000e+00> : vector<8x128xf32>
      %30 = tpu.matmul %28, %29, %cst_18 {dimension_numbers = #tpu.dot_dimension_numbers<[1], [0], [0], [1], [0, 0, 1, 1], [], []>} : vector<8x128xbf16>, vector<128x128xbf16>, vector<8x128xf32> -> vector<8x128xf32>
      %c0_19 = arith.constant 0 : index
      %c0_20 = arith.constant 0 : index
      %31 = vector.load %arg6[%c0_19, %c0_20] : memref<1x128xf32, #tpu.memory_space<vmem>>, vector<1x128xf32>
      %32 = vector.broadcast %31 : vector<1x128xf32> to vector<8x128xf32>
      %33 = arith.addf %30, %32 : vector<8x128xf32>
      %34 = arith.mulf %33, %33 : vector<8x128xf32>
      %cst_21 = arith.constant dense<0.000000e+00> : vector<8xf32>
      %35 = vector.multi_reduction <add>, %34, %cst_21 [1] : vector<8x128xf32> to vector<8xf32>
      %36 = vector.shape_cast %35 : vector<8xf32> to vector<8x1xf32>
      %37 = math.sqrt %36 : vector<8x1xf32>
      %cst_22 = arith.constant 9.99999997E-7 : f32
      %38 = vector.broadcast %cst_22 : f32 to vector<8x1xf32>
      %39 = arith.addf %37, %38 : vector<8x1xf32>
      %cst_23 = arith.constant 1.000000e+00 : f32
      %40 = vector.broadcast %cst_23 : f32 to vector<8x1xf32>
      %41 = arith.divf %40, %39 : vector<8x1xf32>
      %42 = vector.broadcast %41 : vector<8x1xf32> to vector<8x128xf32>
      %43 = arith.mulf %33, %42 : vector<8x128xf32>
      %c0_24 = arith.constant 0 : index
      %c0_25 = arith.constant 0 : index
      %44 = vector.load %arg7[%c0_24, %c0_25] : memref<8x128xf32, #tpu.memory_space<vmem>>, vector<8x128xf32>
      tpu.vector_store %arg7[%c0_24, %c0_25], %43 {strides = array<i32>} : memref<8x128xf32, #tpu.memory_space<vmem>>, vector<8x128xf32>,
    } else {
    }
    return
  }
  func.func @transform_0(%arg0: i32, %arg1: i32) -> (i32, i32, i32) {
    %c0_i32 = arith.constant 0 : i32
    %c0_i32_0 = arith.constant 0 : i32
    return %arg0, %arg1, %c0_i32 : i32, i32, i32
  }
  func.func @transform_1(%arg0: i32, %arg1: i32) -> (i32, i32) {
    %c0_i32 = arith.constant 0 : i32
    %c0_i32_0 = arith.constant 0 : i32
    %c0_i32_1 = arith.constant 0 : i32
    return %c0_i32, %c0_i32_0 : i32, i32
  }
  func.func @transform_2(%arg0: i32, %arg1: i32) -> (i32, i32) {
    %c0_i32 = arith.constant 0 : i32
    %c0_i32_0 = arith.constant 0 : i32
    %c0_i32_1 = arith.constant 0 : i32
    return %c0_i32, %c0_i32_0 : i32, i32
  }
  func.func @transform_3(%arg0: i32, %arg1: i32) -> (i32, i32) {
    %c0_i32 = arith.constant 0 : i32
    %c0_i32_0 = arith.constant 0 : i32
    %c0_i32_1 = arith.constant 0 : i32
    return %c0_i32, %c0_i32_0 : i32, i32
  }
  func.func @transform_4(%arg0: i32, %arg1: i32) -> (i32, i32) {
    %c0_i32 = arith.constant 0 : i32
    %c0_i32_0 = arith.constant 0 : i32
    %c0_i32_1 = arith.constant 0 : i32
    return %c0_i32, %c0_i32_0 : i32, i32
  }
  func.func @transform_5(%arg0: i32, %arg1: i32) -> (i32, i32) {
    %c0_i32 = arith.constant 0 : i32
    %c0_i32_0 = arith.constant 0 : i32
    return %arg0, %c0_i32 : i32, i32
  }
}

</mosaic_0001>

<llo_original>
// kernel: tpu_custom_call.1
$region0: #{tpu_custom_call.1}
  #allocation0 [shape = 'u32[]', space=smem, size = 0x4, offset = 0x4, fixed_abs, tag = 'smem constant byte address 0x4 - core index']
  #allocation1 [shape = 'u32[144,128]{1,0:T(1,128)}', space=vmem, size = 0x12000, scoped, tag = 'internal scratch']
  #allocation2 [shape = 'f32[8,128]{1,0:T(8,128)}', space=vmem, size = 0x1000, scoped, tag = 'scratch operand']
  #allocation9 [shape = 's32[]', space=sflag, size = 0x4, offset = 0, fixed_abs, tag = 'sflag constant byte address 0x0 - dummy sync flag']
  %s0 = inlined_call_operand.hbm [shape: bf16[16,64,128], index: 0, kind: input, shape index: {}]
  %s1 = inlined_call_operand.vmem [shape: f32[1,128], index: 1, kind: input, shape index: {}]
  %s2 = inlined_call_operand.vmem [shape: f32[1,128], index: 2, kind: input, shape index: {}]
  %s3 = inlined_call_operand.hbm [shape: bf16[128,128], index: 3, kind: input, shape index: {}]
  %s4 = inlined_call_operand.vmem [shape: f32[1,128], index: 4, kind: input, shape index: {}]
  %s5 = inlined_call_operand.hbm [shape: f32[16,128], index: 5, kind: output, shape index: {}]
  %s6 = sld [smem:[#allocation0]]
  $region69: #{tpu_custom_call.1} parent=0
    _
  %s8 = ssub.s32 1, %s6
  %s9 = scalar_select 0, %s8, %s6
  $region1: #{tpu_custom_call.1} parent=0
    #allocation3 [shape = 'u8[65536]{0}', space=vmem, size = 0x10000, scoped, tag = 'input window, operand 0']
    #allocation4 [shape = 's32[2]{0}', space=sflag, size = 0x8, scoped, tag = 'scoped memory for tpu_custom_call.1']
    #allocation5 [shape = 's32[2]{0}', space=sflag, size = 0x8, scoped, tag = 'scoped memory for tpu_custom_call.1']
    #allocation6 [shape = 'u8[32768]{0}', space=vmem, size = 0x8000, scoped, tag = 'input window, operand 3, single buffered']
    #allocation7 [shape = 's32[1]{0}', space=sflag, size = 0x4, scoped, tag = 'scoped memory for tpu_custom_call.1']
    #allocation8 [shape = 'u8[8192]{0}', space=vmem, size = 0x2000, scoped, tag = 'output window, operand 0']
    %10 = vsyncpa [#allocation4], 0
    %s11 = scalar_lea.sflag [#allocation4], 1
    %12 = vsyncpa %s11, 0
    %13 = vsyncpa [#allocation7], 0
    %14 = vsyncpa [#allocation5], 0
    %s15 = scalar_lea.sflag [#allocation5], 1
    %16 = vsyncpa %s15, 0
    loop: start=0, step=1, limit=10
    $region2: #{tpu_custom_call.1} parent=1 // loop_pre_header
      _
    $region3: #{tpu_custom_call.1} parent=1 // loop_header
      %s18 = sphi 0, %s22
      %p19 = scmp.ge.s32.totalorder %s18, 10
      %s25 = sphi 0, %s37
      %s26 = sphi 0, %s33
      %s27 = sphi 0, %s25
      %s28 = sphi 0, %s26
      %s29 = sphi 0, %s27
      %s30 = sphi 0, %s28
      %s42 = sphi 0, %s44
      %s45 = sphi 0, %s42
      %s46 = sphi 0, %s45
      %s62 = sphi 0, %s46
      %s66 = sphi 0, %s66
      %s68 = sphi 0, %s66
      %s69 = sphi 0, %s68
      %s83 = sphi 0, %s69
      %s87 = sphi 0, %s87
      %s89 = sphi 0, %s87
      %s90 = sphi 0, %s89
      %s104 = sphi 0, %s90
      %s108 = sphi 0, %s108
      %s110 = sphi 0, %s108
      %s111 = sphi 0, %s110
      %s125 = sphi 0, %s111
      %s129 = sphi 0, %s129
      %s131 = sphi 0, %s129
      %s132 = sphi 0, %s131
      %s146 = sphi 0, %s132
      %s152 = sphi 0, %s154
      %s155 = sphi 0, %s152
      %s156 = sphi 0, %s155
      %s172 = sphi 0, %s156
    $region4: #{tpu_custom_call.1} parent=1 // loop_header_branch
      %21 = sbr.rel (%p19) target = $region8
    $region5: #{tpu_custom_call.1} parent=1 // loop_body
      %s23 = ssub.s32 %s18, 1
      %s24 = ssub.s32 %s18, 2
      %s31 = sadd.s32 1, %s26
      %p32 = scmp.ge.s32.totalorder %s31, 4
      %s33 = scalar_select %p32, 0, %s31
      %s34 = sadd.s32 1, %s25
      %s35 = scalar_select %p32, %s34, %s25
      %p36 = scmp.ge.s32.totalorder %s35, 2
      %s37 = scalar_select %p36, 0, %s35
      %s38 = ssub.s32 %s25, %s37
      %s39 = ssub.s32 %s26, %s33
      %s40 = sor.u32 %s38, %s39
      %p41 = scmp.eq.s32.totalorder %s40, 0
      %s43 = sadd.s32 %s42, 1
      %s44 = scalar_select %p41, %s42, %s43
      %p47 = pneg %p41
      %p48 = scmp.eq.s32.totalorder %s18, 7
      %p49 = por %p47, %p48
      %p50 = scmp.ne.s32.totalorder %s42, %s45
      %p51 = scmp.eq.s32.totalorder %s18, 0
      %p52 = por %p50, %p51
      %p53 = scmp.ne.s32.totalorder %s42, %s45
      %p54 = scmp.eq.s32.totalorder %s23, 7
      %p55 = por %p53, %p54
      %p56 = scmp.ne.s32.totalorder %s45, %s46
      %p57 = scmp.eq.s32.totalorder %s23, 0
      %p58 = por %p56, %p57
      %p59 = scmp.ne.s32.totalorder %s45, %s46
      %p60 = scmp.eq.s32.totalorder %s24, 7
      %p61 = por %p59, %p60
      %p63 = scmp.ne.s32.totalorder %s46, %s62
      %p64 = scmp.eq.s32.totalorder %s24, 0
      %p65 = por %p63, %p64
      %s67 = sadd.s32 %s66, 1
      %p70 = scmp.eq.s32.totalorder %s18, 7
      %p71 = scmp.ne.s32.totalorder %s66, %s68
      %p72 = scmp.eq.s32.totalorder %s18, 0
      %p73 = por %p71, %p72
      %p74 = scmp.ne.s32.totalorder %s66, %s68
      %p75 = scmp.eq.s32.totalorder %s23, 7
      %p76 = por %p74, %p75
      %p77 = scmp.ne.s32.totalorder %s68, %s69
      %p78 = scmp.eq.s32.totalorder %s23, 0
      %p79 = por %p77, %p78
      %p80 = scmp.ne.s32.totalorder %s68, %s69
      %p81 = scmp.eq.s32.totalorder %s24, 7
      %p82 = por %p80, %p81
      %p84 = scmp.ne.s32.totalorder %s69, %s83
      %p85 = scmp.eq.s32.totalorder %s24, 0
      %p86 = por %p84, %p85
      %s88 = sadd.s32 %s87, 1
      %p91 = scmp.eq.s32.totalorder %s18, 7
      %p92 = scmp.ne.s32.totalorder %s87, %s89
      %p93 = scmp.eq.s32.totalorder %s18, 0
      %p94 = por %p92, %p93
      %p95 = scmp.ne.s32.totalorder %s87, %s89
      %p96 = scmp.eq.s32.totalorder %s23, 7
      %p97 = por %p95, %p96
      %p98 = scmp.ne.s32.totalorder %s89, %s90
      %p99 = scmp.eq.s32.totalorder %s23, 0
      %p100 = por %p98, %p99
      %p101 = scmp.ne.s32.totalorder %s89, %s90
      %p102 = scmp.eq.s32.totalorder %s24, 7
      %p103 = por %p101, %p102
      %p105 = scmp.ne.s32.totalorder %s90, %s104
      %p106 = scmp.eq.s32.totalorder %s24, 0
      %p107 = por %p105, %p106
      %s109 = sadd.s32 %s108, 1
      %p112 = scmp.eq.s32.totalorder %s18, 7
      %p113 = scmp.ne.s32.totalorder %s108, %s110
      %p114 = scmp.eq.s32.totalorder %s18, 0
      %p115 = por %p113, %p114
      %p116 = scmp.ne.s32.totalorder %s108, %s110
      %p117 = scmp.eq.s32.totalorder %s23, 7
      %p118 = por %p116, %p117
      %p119 = scmp.ne.s32.totalorder %s110, %s111
      %p120 = scmp.eq.s32.totalorder %s23, 0
      %p121 = por %p119, %p120
      %p122 = scmp.ne.s32.totalorder %s110, %s111
      %p123 = scmp.eq.s32.totalorder %s24, 7
      %p124 = por %p122, %p123
      %p126 = scmp.ne.s32.totalorder %s111, %s125
      %p127 = scmp.eq.s32.totalorder %s24, 0
      %p128 = por %p126, %p127
      %s130 = sadd.s32 %s129, 1
      %p133 = scmp.eq.s32.totalorder %s18, 7
      %p134 = scmp.ne.s32.totalorder %s129, %s131
      %p135 = scmp.eq.s32.totalorder %s18, 0
      %p136 = por %p134, %p135
      %p137 = scmp.ne.s32.totalorder %s129, %s131
      %p138 = scmp.eq.s32.totalorder %s23, 7
      %p139 = por %p137, %p138
      %p140 = scmp.ne.s32.totalorder %s131, %s132
      %p141 = scmp.eq.s32.totalorder %s23, 0
      %p142 = por %p140, %p141
      %p143 = scmp.ne.s32.totalorder %s131, %s132
      %p144 = scmp.eq.s32.totalorder %s24, 7
      %p145 = por %p143, %p144
      %p147 = scmp.ne.s32.totalorder %s132, %s146
      %p148 = scmp.eq.s32.totalorder %s24, 0
      %p149 = por %p147, %p148
      %s150 = ssub.s32 %s25, %s37
      %p151 = scmp.eq.s32.totalorder %s150, 0
      %s153 = sadd.s32 %s152, 1
      %s154 = scalar_select %p151, %s152, %s153
      %p157 = pneg %p151
      %p158 = scmp.eq.s32.totalorder %s18, 7
      %p159 = por %p157, %p158
      %p160 = scmp.ne.s32.totalorder %s152, %s155
      %p161 = scmp.eq.s32.totalorder %s18, 0
      %p162 = por %p160, %p161
      %p163 = scmp.ne.s32.totalorder %s152, %s155
      %p164 = scmp.eq.s32.totalorder %s23, 7
      %p165 = por %p163, %p164
      %p166 = scmp.ne.s32.totalorder %s155, %s156
      %p167 = scmp.eq.s32.totalorder %s23, 0
      %p168 = por %p166, %p167
      %p169 = scmp.ne.s32.totalorder %s155, %s156
      %p170 = scmp.eq.s32.totalorder %s24, 7
      %p171 = por %p169, %p170
      %p173 = scmp.ne.s32.totalorder %s156, %s172
      %p174 = scmp.eq.s32.totalorder %s24, 0
      %p175 = por %p173, %p174
      %p176 = scmp.le.s32.totalorder 1, %s18
      %p177 = scmp.lt.s32.totalorder %s18, 9
      %p178 = pnand %p176, %p177
      %p179 = pneg %p178
      // Predicated region
      $region9: #{tpu_custom_call.1} parent=5 // pred_check
        _
      $region10: #{tpu_custom_call.1} parent=5 // pred_check_branch
        %181 = sbr.rel (%p178) target = $region12
      $region11: #{tpu_custom_call.1} parent=5 // pred_region
        %s182 = ssub.s32 %s18, 1
        // Predicated region
        $region13: #{tpu_custom_call.1} parent=11 // pred_check
          %p183 = pneg %p79
        $region14: #{tpu_custom_call.1} parent=11 // pred_check_branch
          %185 = sbr.rel (%p183) target = $region16
        $region15: #{tpu_custom_call.1} parent=11 // pred_region
          _
        $region16: #{tpu_custom_call.1} parent=11 // pred_fallthru
          _
        // Predicated region
        $region17: #{tpu_custom_call.1} parent=11 // pred_check
          %p186 = pneg %p100
        $region18: #{tpu_custom_call.1} parent=11 // pred_check_branch
          %188 = sbr.rel (%p186) target = $region20
        $region19: #{tpu_custom_call.1} parent=11 // pred_region
          _
        $region20: #{tpu_custom_call.1} parent=11 // pred_fallthru
          _
        // Predicated region
        $region21: #{tpu_custom_call.1} parent=11 // pred_check
          %p189 = pneg %p121
        $region22: #{tpu_custom_call.1} parent=11 // pred_check_branch
          %191 = sbr.rel (%p189) target = $region24
        $region23: #{tpu_custom_call.1} parent=11 // pred_region
          %s193 = ssub.s32 1024, 1024
          %194 = vsyncadd [#allocation7], %s193
          %s195 = sshll.u32 [#allocation6], 4
          %s196 = int_to_ptr.vmem [resolvable:$true] %s195
          %201 = dma.hbm_to_vmem [thread:$0]  %s3, 1024, %s196, [#allocation7], 64, 64, 4
        $region24: #{tpu_custom_call.1} parent=11 // pred_fallthru
          _
        // Predicated region
        $region25: #{tpu_custom_call.1} parent=11 // pred_check
          %p202 = pneg %p142
        $region26: #{tpu_custom_call.1} parent=11 // pred_check_branch
          %204 = sbr.rel (%p202) target = $region28
        $region27: #{tpu_custom_call.1} parent=11 // pred_region
          _
        $region28: #{tpu_custom_call.1} parent=11 // pred_fallthru
          _
      $region12: #{tpu_custom_call.1} parent=5 // pred_fallthru
        _
      %p205 = scmp.lt.s32.totalorder %s18, 8
      // Predicated region
      $region29: #{tpu_custom_call.1} parent=5 // pred_check
        %p206 = pneg %p205
      $region30: #{tpu_custom_call.1} parent=5 // pred_check_branch
        %208 = sbr.rel (%p206) target = $region32
      $region31: #{tpu_custom_call.1} parent=5 // pred_region
        // Predicated region
        $region33: #{tpu_custom_call.1} parent=31 // pred_check
          %p209 = pneg %p52
        $region34: #{tpu_custom_call.1} parent=31 // pred_check_branch
          %211 = sbr.rel (%p209) target = $region36
        $region35: #{tpu_custom_call.1} parent=31 // pred_region
          #allocation10 [shape = 'u32[6]{0}', space=smem, size = 0x18, scoped, tag = 'DMA stride descriptor']
          %s212 = sand.u32 %s42, 1
          %s213 = scalar_lea.sflag [#allocation4], %s212
          %s214 = sand.u32 %s42, 1
          %s215 = smul.addr %s214, 64
          %s216 = scalar_lea.vmem [#allocation3], %s215
          %s217 = smul.u32 8, %s25
          %s218 = smul.u32 2, %s26
          %s220 = ssub.s32 1024, 1024
          %221 = vsyncadd %s213, %s220
          %s222 = smul.addr %s217, 8
          %s223 = sadd.s32 %s218, %s222
          %s224 = smul.addr %s223, 64
          %s225 = scalar_lea.hbm %s0, %s224
          %s227 = sshll.u32 1, 14
          %s228 = sxor.u32 4294967295, %s227
          %s230 = sld [smem:[#allocation0]]
          %s231 = sadd.s32 2, %s230
          %s233 = sshll.u32 7, 26
          %s234 = sxor.u32 4294967295, %s233
          %s235 = sand.u32 0, %s234
          %s236 = sshll.u32 %s231, 26
          %s237 = sor.u32 %s235, %s236
          %s238 = sshll.u32 %s216, 4
          %s239 = int_to_ptr.vmem [resolvable:$true] %s238
          %245 = sst [smem:[#allocation10]] 512
          %s246 = scalar_lea.smem [#allocation10], 1
          %247 = sst [smem:[%s246]] 128
          %s248 = scalar_lea.smem [#allocation10], 2
          %249 = sst [smem:[%s248]] 2
          %s250 = scalar_lea.smem [#allocation10], 3
          %251 = sst [smem:[%s250]] 64
          %s252 = scalar_lea.smem [#allocation10], 4
          %253 = sst [smem:[%s252]] 64
          %s254 = scalar_lea.smem [#allocation10], 5
          %255 = sst [smem:[%s254]] 4
          %257 = dma.general %s225, 1024, %s239, %s213, [#allocation9], [#allocation10], %s237, 0
        $region36: #{tpu_custom_call.1} parent=31 // pred_fallthru
          _
      $region32: #{tpu_custom_call.1} parent=5 // pred_fallthru
        _
      %p258 = scmp.le.s32.totalorder 1, %s18
      %p259 = scmp.lt.s32.totalorder %s18, 9
      %p260 = pnand %p258, %p259
      %p261 = pneg %p260
      // Predicated region
      $region37: #{tpu_custom_call.1} parent=5 // pred_check
        _
      $region38: #{tpu_custom_call.1} parent=5 // pred_check_branch
        %263 = sbr.rel (%p260) target = $region40
      $region39: #{tpu_custom_call.1} parent=5 // pred_region
        %s264 = ssub.s32 %s18, 1
        %s265 = sand.u32 %s45, 1
        %s266 = scalar_lea.sflag [#allocation4], %s265
        %s267 = sand.u32 %s45, 1
        %s268 = smul.addr %s267, 64
        %s269 = scalar_lea.vmem [#allocation3], %s268
        // Predicated region
        $region41: #{tpu_custom_call.1} parent=39 // pred_check
          %p270 = pneg %p58
        $region42: #{tpu_custom_call.1} parent=39 // pred_check_branch
          %272 = sbr.rel (%p270) target = $region44
        $region43: #{tpu_custom_call.1} parent=39 // pred_region
          %273 = dma.done %s266, 1024
        $region44: #{tpu_custom_call.1} parent=39 // pred_fallthru
          _
        // Predicated region
        $region45: #{tpu_custom_call.1} parent=39 // pred_check
          %p274 = pneg %p121
        $region46: #{tpu_custom_call.1} parent=39 // pred_check_branch
          %276 = sbr.rel (%p274) target = $region48
        $region47: #{tpu_custom_call.1} parent=39 // pred_region
          %277 = dma.done [#allocation7], 1024
        $region48: #{tpu_custom_call.1} parent=39 // pred_fallthru
          _
        %s278 = sand.u32 %s45, 1
        %s279 = scalar_lea.sflag [#allocation4], %s278
        %s280 = sand.u32 %s45, 1
        %s281 = smul.addr %s280, 64
        %s282 = scalar_lea.vmem [#allocation3], %s281
        %p283 = pneg %p58
        %p284 = pneg %p55
        %p285 = pneg %p79
        %p286 = pneg %p76
        %p287 = pneg %p100
        %p288 = pneg %p97
        %p289 = pneg %p121
        %p290 = pneg %p118
        %p291 = pneg %p142
        %p292 = pneg %p139
        %p293 = pneg %p168
        %p294 = pneg %p165
        %s295 = sand.u32 %s155, 1
        %s296 = scalar_lea.sflag [#allocation5], %s295
        %s297 = sand.u32 %s155, 1
        %s298 = smul.addr %s297, 8
        %s299 = scalar_lea.vmem [#allocation8], %s298
        %s300 = smul.u32 8, %s27
        %s301 = smul.u32 2, %s28
        %p303 = scmp.eq.s32.totalorder %s28, 0
        // Predicated region
        $region49: #{tpu_custom_call.1} parent=39 // pred_check
          %p304 = pneg %p303
        $region50: #{tpu_custom_call.1} parent=39 // pred_check_branch
          %306 = sbr.rel (%p304) target = $region52
        $region51: #{tpu_custom_call.1} parent=39 // pred_region
          %307 = vst [vmem:[#allocation2] sm:$0xff] 0.0
        $region52: #{tpu_custom_call.1} parent=39 // pred_fallthru
          _
        %v308 = vld [vmem:[%s1] sm:$0x1]
        %v309 = vld [vmem:[%s269] sm:$0xf]
        %v310 = vld [vmem:[%s269 + $0x4] sm:$0xf]
        %v311 = vld [vmem:[%s269 + $0x8] sm:$0xf]
        %v312 = vld [vmem:[%s269 + $0xc] sm:$0xf]
        %v313 = vld [vmem:[%s269 + $0x10] sm:$0xf]
        %v314 = vld [vmem:[%s269 + $0x14] sm:$0xf]
        %v315 = vld [vmem:[%s269 + $0x18] sm:$0xf]
        %v316 = vld [vmem:[%s269 + $0x1c] sm:$0xf]
        %v317 = vld [vmem:[%s269 + $0x20] sm:$0xf]
        %v318 = vld [vmem:[%s269 + $0x24] sm:$0xf]
        %v319 = vld [vmem:[%s269 + $0x28] sm:$0xf]
        %v320 = vld [vmem:[%s269 + $0x2c] sm:$0xf]
        %v321 = vld [vmem:[%s269 + $0x30] sm:$0xf]
        %v322 = vld [vmem:[%s269 + $0x34] sm:$0xf]
        %v323 = vld [vmem:[%s269 + $0x38] sm:$0xf]
        %v324 = vld [vmem:[%s269 + $0x3c] sm:$0xf]
        %v325 = vunpack.c.l.bf16 %v309
        %v326 = vunpack.c.l.bf16 %v310
        %v327 = vunpack.c.l.bf16 %v311
        %v328 = vunpack.c.l.bf16 %v312
        %v329 = vunpack.c.l.bf16 %v313
        %v330 = vunpack.c.l.bf16 %v314
        %v331 = vunpack.c.l.bf16 %v315
        %v332 = vunpack.c.l.bf16 %v316
        %v333 = vunpack.c.l.bf16 %v317
        %v334 = vunpack.c.l.bf16 %v318
        %v335 = vunpack.c.l.bf16 %v319
        %v336 = vunpack.c.l.bf16 %v320
        %v337 = vunpack.c.l.bf16 %v321
        %v338 = vunpack.c.l.bf16 %v322
        %v339 = vunpack.c.l.bf16 %v323
        %v340 = vunpack.c.l.bf16 %v324
        %v341 = vmax.f32 %v325, 1e-06
        %v342 = vmax.f32 %v326, 1e-06
        %v343 = vmax.f32 %v327, 1e-06
        %v344 = vmax.f32 %v328, 1e-06
        %v345 = vmax.f32 %v329, 1e-06
        %v346 = vmax.f32 %v330, 1e-06
        %v347 = vmax.f32 %v331, 1e-06
        %v348 = vmax.f32 %v332, 1e-06
        %v349 = vmax.f32 %v333, 1e-06
        %v350 = vmax.f32 %v334, 1e-06
        %v351 = vmax.f32 %v335, 1e-06
        %v352 = vmax.f32 %v336, 1e-06
        %v353 = vmax.f32 %v337, 1e-06
        %v354 = vmax.f32 %v338, 1e-06
        %v355 = vmax.f32 %v339, 1e-06
        %v356 = vmax.f32 %v340, 1e-06
        %v357 = vlog2.pop %v341
        %v358 = vmul.f32 %v357, 0.6931472
        %v359 = vlog2.pop %v342
        %v360 = vmul.f32 %v359, 0.6931472
        %v361 = vlog2.pop %v343
        %v362 = vmul.f32 %v361, 0.6931472
        %v363 = vlog2.pop %v344
        %v364 = vmul.f32 %v363, 0.6931472
        %v365 = vlog2.pop %v345
        %v366 = vmul.f32 %v365, 0.6931472
        %v367 = vlog2.pop %v346
        %v368 = vmul.f32 %v367, 0.6931472
        %v369 = vlog2.pop %v347
        %v370 = vmul.f32 %v369, 0.6931472
        %v371 = vlog2.pop %v348
        %v372 = vmul.f32 %v371, 0.6931472
        %v373 = vlog2.pop %v349
        %v374 = vmul.f32 %v373, 0.6931472
        %v375 = vlog2.pop %v350
        %v376 = vmul.f32 %v375, 0.6931472
        %v377 = vlog2.pop %v351
        %v378 = vmul.f32 %v377, 0.6931472
        %v379 = vlog2.pop %v352
        %v380 = vmul.f32 %v379, 0.6931472
        %v381 = vlog2.pop %v353
        %v382 = vmul.f32 %v381, 0.6931472
        %v383 = vlog2.pop %v354
        %v384 = vmul.f32 %v383, 0.6931472
        %v385 = vlog2.pop %v355
        %v386 = vmul.f32 %v385, 0.6931472
        %v387 = vlog2.pop %v356
        %v388 = vmul.f32 %v387, 0.6931472
        %v390 = vlaneseq
        %v391 = vshrl.u32 %v390, 7
        %v392 = vsub.s32 0, %v391
        %v393 = vrot.slane %v308, %v392
        %v395 = vmul.f32 %v393, %v358
        %v396 = vmul.f32 %v393, %v360
        %v397 = vmul.f32 %v393, %v362
        %v398 = vmul.f32 %v393, %v364
        %v399 = vmul.f32 %v393, %v366
        %v400 = vmul.f32 %v393, %v368
        %v401 = vmul.f32 %v393, %v370
        %v402 = vmul.f32 %v393, %v372
        %v403 = vmul.f32 %v393, %v374
        %v404 = vmul.f32 %v393, %v376
        %v405 = vmul.f32 %v393, %v378
        %v406 = vmul.f32 %v393, %v380
        %v407 = vmul.f32 %v393, %v382
        %v408 = vmul.f32 %v393, %v384
        %v409 = vmul.f32 %v393, %v386
        %v410 = vmul.f32 %v393, %v388
        %v411 = vmul.f32 %v395, 1.442695
        %v412 = vpow.pop %v411
        %v413 = vmul.f32 %v396, 1.442695
        %v414 = vpow.pop %v413
        %v415 = vmul.f32 %v397, 1.442695
        %v416 = vpow.pop %v415
        %v417 = vmul.f32 %v398, 1.442695
        %v418 = vpow.pop %v417
        %v419 = vmul.f32 %v399, 1.442695
        %v420 = vpow.pop %v419
        %v421 = vmul.f32 %v400, 1.442695
        %v422 = vpow.pop %v421
        %v423 = vmul.f32 %v401, 1.442695
        %v424 = vpow.pop %v423
        %v425 = vmul.f32 %v402, 1.442695
        %v426 = vpow.pop %v425
        %v427 = vmul.f32 %v403, 1.442695
        %v428 = vpow.pop %v427
        %v429 = vmul.f32 %v404, 1.442695
        %v430 = vpow.pop %v429
        %v431 = vmul.f32 %v405, 1.442695
        %v432 = vpow.pop %v431
        %v433 = vmul.f32 %v406, 1.442695
        %v434 = vpow.pop %v433
        %v435 = vmul.f32 %v407, 1.442695
        %v436 = vpow.pop %v435
        %v437 = vmul.f32 %v408, 1.442695
        %v438 = vpow.pop %v437
        %v439 = vmul.f32 %v409, 1.442695
        %v440 = vpow.pop %v439
        %v441 = vmul.f32 %v410, 1.442695
        %v442 = vpow.pop %v441
        %v443 = vld [vmem:[#allocation2] sm:$0xff]
        %v444 = vadd.f32 %v412, %v414
        %v445 = vrot.slane %v444, 4
        %v446 = vadd.f32 %v444, %v445
        %v447 = vrot.slane %v446, 2
        %v448 = vadd.f32 %v446, %v447
        %v449 = vrot.slane %v448, 1
        %v450 = vadd.f32 %v448, %v449
        %v451 = vadd.f32 %v416, %v418
        %v452 = vrot.slane %v451, 4
        %v453 = vadd.f32 %v451, %v452
        %v454 = vrot.slane %v453, 2
        %v455 = vadd.f32 %v453, %v454
        %v456 = vrot.slane %v455, 1
        %v457 = vadd.f32 %v455, %v456
        %v458 = vadd.f32 %v420, %v422
        %v459 = vrot.slane %v458, 4
        %v460 = vadd.f32 %v458, %v459
        %v461 = vrot.slane %v460, 2
        %v462 = vadd.f32 %v460, %v461
        %v463 = vrot.slane %v462, 1
        %v464 = vadd.f32 %v462, %v463
        %v465 = vadd.f32 %v424, %v426
        %v466 = vrot.slane %v465, 4
        %v467 = vadd.f32 %v465, %v466
        %v468 = vrot.slane %v467, 2
        %v469 = vadd.f32 %v467, %v468
        %v470 = vrot.slane %v469, 1
        %v471 = vadd.f32 %v469, %v470
        %v472 = vadd.f32 %v428, %v430
        %v473 = vrot.slane %v472, 4
        %v474 = vadd.f32 %v472, %v473
        %v475 = vrot.slane %v474, 2
        %v476 = vadd.f32 %v474, %v475
        %v477 = vrot.slane %v476, 1
        %v478 = vadd.f32 %v476, %v477
        %v479 = vadd.f32 %v432, %v434
        %v480 = vrot.slane %v479, 4
        %v481 = vadd.f32 %v479, %v480
        %v482 = vrot.slane %v481, 2
        %v483 = vadd.f32 %v481, %v482
        %v484 = vrot.slane %v483, 1
        %v485 = vadd.f32 %v483, %v484
        %v486 = vadd.f32 %v436, %v438
        %v487 = vrot.slane %v486, 4
        %v488 = vadd.f32 %v486, %v487
        %v489 = vrot.slane %v488, 2
        %v490 = vadd.f32 %v488, %v489
        %v491 = vrot.slane %v490, 1
        %v492 = vadd.f32 %v490, %v491
        %v493 = vadd.f32 %v440, %v442
        %v494 = vrot.slane %v493, 4
        %v495 = vadd.f32 %v493, %v494
        %v496 = vrot.slane %v495, 2
        %v497 = vadd.f32 %v495, %v496
        %v498 = vrot.slane %v497, 1
        %v499 = vadd.f32 %v497, %v498
        %vm508 = vcmask 1041409
        %v509 = vsel %vm508, %v457, %v450
        %vm510 = vcmask 1042434
        %v511 = vsel %vm510, %v464, %v509
        %vm512 = vcmask 1043459
        %v513 = vsel %vm512, %v471, %v511
        %vm514 = vcmask 1044484
        %v515 = vsel %vm514, %v478, %v513
        %vm516 = vcmask 1045509
        %v517 = vsel %vm516, %v485, %v515
        %vm518 = vcmask 1046534
        %v519 = vsel %vm518, %v492, %v517
        %vm520 = vcmask 1047559
        %v521 = vsel %vm520, %v499, %v519
        %v523 = vadd.f32 %v443, %v521
        %524 = vst [vmem:[#allocation2] sm:$0xff] %v523
        %p525 = scmp.eq.s32.totalorder %s28, 3
        // Predicated region
        $region53: #{tpu_custom_call.1} parent=39 // pred_check
          %p526 = pneg %p525
        $region54: #{tpu_custom_call.1} parent=39 // pred_check_branch
          %528 = sbr.rel (%p526) target = $region56
        $region55: #{tpu_custom_call.1} parent=39 // pred_region
          %v529 = vld [vmem:[#allocation2] sm:$0xff]
          %v530 = vmul.f32 %v529, 0.015625
          %v531 = vlog2.pop %v530
          %v532 = vmul.f32 %v531, 0.6931472
          %v533 = vld [vmem:[%s2] sm:$0x1]
          %v535 = vlaneseq
          %v536 = vshrl.u32 %v535, 7
          %v537 = vsub.s32 0, %v536
          %v538 = vrot.slane %v533, %v537
          %v540 = vmul.f32 %v532, %v538
          %v541 = vmul.f32 %v540, 1.442695
          %v542 = vpow.pop %v541
          %v543 = vpack.c.bf16 %v542, %v542
          %v544 = vld [vmem:[#allocation6] sm:$0xf]
          %v545 = vld [vmem:[#allocation6 + $0x4] sm:$0xf]
          %v546 = vld [vmem:[#allocation6 + $0x8] sm:$0xf]
          %v547 = vld [vmem:[#allocation6 + $0xc] sm:$0xf]
          %v548 = vld [vmem:[#allocation6 + $0x10] sm:$0xf]
          %v549 = vld [vmem:[#allocation6 + $0x14] sm:$0xf]
          %v550 = vld [vmem:[#allocation6 + $0x18] sm:$0xf]
          %v551 = vld [vmem:[#allocation6 + $0x1c] sm:$0xf]
          %v552 = vld [vmem:[#allocation6 + $0x20] sm:$0xf]
          %v553 = vld [vmem:[#allocation6 + $0x24] sm:$0xf]
          %v554 = vld [vmem:[#allocation6 + $0x28] sm:$0xf]
          %v555 = vld [vmem:[#allocation6 + $0x2c] sm:$0xf]
          %v556 = vld [vmem:[#allocation6 + $0x30] sm:$0xf]
          %v557 = vld [vmem:[#allocation6 + $0x34] sm:$0xf]
          %v558 = vld [vmem:[#allocation6 + $0x38] sm:$0xf]
          %v559 = vld [vmem:[#allocation6 + $0x3c] sm:$0xf]
          %v560 = vld [vmem:[%s4] sm:$0x1]
          %v562 = vlaneseq
          %v563 = vshrl.u32 %v562, 7
          %v564 = vsub.s32 0, %v563
          %v565 = vrot.slane %v560, %v564
          %v583 = vunpack.c.l.b16 %v544
          %v584 = vunpack.c.l.b16 %v545
          %v585 = vunpack.c.l.b16 %v546
          %v586 = vunpack.c.l.b16 %v547
          %v587 = vunpack.c.l.b16 %v548
          %v588 = vunpack.c.l.b16 %v549
          %v589 = vunpack.c.l.b16 %v550
          %v590 = vunpack.c.l.b16 %v551
          %v591 = vunpack.c.l.b16 %v552
          %v592 = vunpack.c.l.b16 %v553
          %v593 = vunpack.c.l.b16 %v554
          %v594 = vunpack.c.l.b16 %v555
          %v595 = vunpack.c.l.b16 %v556
          %v596 = vunpack.c.l.b16 %v557
          %v597 = vunpack.c.l.b16 %v558
          %v598 = vunpack.c.l.b16 %v559
          %v599 = vpack.c.b16 %v584, %v583
          %v600 = vpack.c.b16 %v586, %v585
          %v601 = vpack.c.b16 %v588, %v587
          %v602 = vpack.c.b16 %v590, %v589
          %v603 = vpack.c.b16 %v592, %v591
          %v604 = vpack.c.b16 %v594, %v593
          %v605 = vpack.c.b16 %v596, %v595
          %v606 = vpack.c.b16 %v598, %v597
          %615 = vmatprep.subr.bf16.mxu0 0
          %616 = vmatpush1.bf16.msra.mxu0 %v599
          %617 = vmatprep.subr.bf16.mxu0 0
          %618 = vmatpush1.bf16.msra.mxu0 %v600
          %619 = vmatprep.subr.bf16.mxu0 0
          %620 = vmatpush1.bf16.msra.mxu0 %v601
          %621 = vmatprep.subr.bf16.mxu0 0
          %622 = vmatpush1.bf16.msra.mxu0 %v602
          %623 = vmatprep.subr.bf16.mxu0 0
          %624 = vmatpush1.bf16.msra.mxu0 %v603
          %625 = vmatprep.subr.bf16.mxu0 0
          %626 = vmatpush1.bf16.msra.mxu0 %v604
          %627 = vmatprep.subr.bf16.mxu0 0
          %628 = vmatpush1.bf16.msra.mxu0 %v605
          %629 = vmatprep.subr.bf16.mxu0 0
          %630 = vmatpush1.bf16.msra.mxu0 %v606
          %631 = vmatprep.subr.bf16.mxu0 0
          %632 = vmatpush1.bf16.msra.mxu0 0
          %633 = vmatprep.subr.bf16.mxu0 0
          %634 = vmatpush1.bf16.msra.mxu0 0
          %635 = vmatprep.subr.bf16.mxu0 0
          %636 = vmatpush1.bf16.msra.mxu0 0
          %637 = vmatprep.subr.bf16.mxu0 0
          %638 = vmatpush1.bf16.msra.mxu0 0
          %639 = vmatprep.subr.bf16.mxu0 0
          %640 = vmatpush1.bf16.msra.mxu0 0
          %641 = vmatprep.subr.bf16.mxu0 0
          %642 = vmatpush1.bf16.msra.mxu0 0
          %643 = vmatprep.subr.bf16.mxu0 0
          %644 = vmatpush1.bf16.msra.mxu0 0
          %645 = vmatprep.subr.bf16.mxu0 0
          %646 = vmatpush1.bf16.msra.mxu0 0
          %647 = vmatprep.mubr.bf16.mxu0 0
          %648 = vmatmul.mubr.bf16.gmra.mrb[0].mxu0 %v543
          %v649 = vpop.f32.mrb[0].mxu0
          %v650 = vadd.f32 %v565, %v649
          %v651 = vpop.f32.mrb[0].mxu0
          %v652 = vpop.f32.mrb[0].mxu0
          %v653 = vpop.f32.mrb[0].mxu0
          %654 = vdwg.mxu0
          %v655 = vmul.f32 %v650, %v650
          %656 = vadd.xlane.f32.xlu0 %v655
          %v657 = vpop.xlane.xlu0 %656
          %v658 = vrsqrt.pop %v657
          %v659 = vmul.f32 %v657, %v658
          %vm660 = vcmp.eq.f32.partialorder %v657, inf
          %v661 = vsel %vm660, %v657, %v659
          %vm662 = vcmp.eq.f32.partialorder %v657, 0.0
          %v663 = vand.u32 %v657, 2147483648
          %v664 = vsel %vm662, %v663, %v661
          %v665 = vadd.f32 %v664, 1e-06
          %v666 = vrcp.pop %v665
          %v667 = vmul.f32 1.0, %v666
          %v668 = vmul.f32 %v650, %v667
          %669 = vst [vmem:[%s299] sm:$0xff] %v668
        $region56: #{tpu_custom_call.1} parent=39 // pred_fallthru
          _
        %s670 = sand.u32 %s155, 1
        %s671 = scalar_lea.sflag [#allocation5], %s670
        %s672 = sand.u32 %s155, 1
        %s673 = smul.addr %s672, 8
        %s674 = scalar_lea.vmem [#allocation8], %s673
        // Predicated region
        $region57: #{tpu_custom_call.1} parent=39 // pred_check
          %p675 = pneg %p165
        $region58: #{tpu_custom_call.1} parent=39 // pred_check_branch
          %677 = sbr.rel (%p675) target = $region60
        $region59: #{tpu_custom_call.1} parent=39 // pred_region
          %s679 = ssub.s32 128, 128
          %680 = vsyncadd %s671, %s679
          %s681 = smul.addr %s27, 128
          %s682 = scalar_lea.hbm %s5, %s681
          %s684 = sshll.u32 %s674, 4
          %s685 = int_to_ptr.vmem [resolvable:$true] %s684
          %687 = dma.vmem_to_hbm [thread:$0]  %s685, 128, %s682, %s671
        $region60: #{tpu_custom_call.1} parent=39 // pred_fallthru
          _
      $region40: #{tpu_custom_call.1} parent=5 // pred_fallthru
        _
      %p688 = scmp.le.s32.totalorder 2, %s18
      // Predicated region
      $region61: #{tpu_custom_call.1} parent=5 // pred_check
        %p689 = pneg %p688
      $region62: #{tpu_custom_call.1} parent=5 // pred_check_branch
        %691 = sbr.rel (%p689) target = $region64
      $region63: #{tpu_custom_call.1} parent=5 // pred_region
        %s692 = ssub.s32 %s18, 2
        // Predicated region
        $region65: #{tpu_custom_call.1} parent=63 // pred_check
          %p693 = pneg %p171
        $region66: #{tpu_custom_call.1} parent=63 // pred_check_branch
          %695 = sbr.rel (%p693) target = $region68
        $region67: #{tpu_custom_call.1} parent=63 // pred_region
          %s696 = sand.u32 %s156, 1
          %s697 = scalar_lea.sflag [#allocation5], %s696
          %s698 = sand.u32 %s156, 1
          %s699 = smul.addr %s698, 8
          %s700 = scalar_lea.vmem [#allocation8], %s699
          %701 = dma.done %s697, 128
        $region68: #{tpu_custom_call.1} parent=63 // pred_fallthru
          _
      $region64: #{tpu_custom_call.1} parent=5 // pred_fallthru
        _
    $region6: #{tpu_custom_call.1} parent=1 // loop_footer
      %s22 = sadd.s32 1, %s18
    $region7: #{tpu_custom_call.1} parent=1 // loop_footer_branch
      %17 = sbr.rel target = $region3
    $region8: #{tpu_custom_call.1} parent=1 // loop_exit
      _
    %702 = vsyncpa [#allocation4], 1
    %s703 = scalar_lea.sflag [#allocation4], 1
    %704 = vsyncpa %s703, 1
    %705 = vsyncpa [#allocation7], 1
    %706 = vsyncpa [#allocation5], 1
    %s707 = scalar_lea.sflag [#allocation5], 1
    %708 = vsyncpa %s707, 1

</llo_original>
